<compile_context>
chip_gen: v5e
topology: v5e:2x2
jax: 0.10.0
libtpu: 0.0.40
codegen_flags: <defaults>
</compile_context>

<pallas_src>
import functools
import math

import jax
import jax.numpy as jnp
from jax.experimental import pallas as pl
from jax.experimental.pallas import tpu as pltpu

LN_EPS = 1e-6  # pytorch_pretrained_vit uses LayerNorm(eps=1e-6)

_BLOCK_PARAM_ORDER = ("ln1_g", "ln1_b", "wqkv", "bqkv", "wo", "bo",
                      "ln2_g", "ln2_b", "w1", "b1", "w2", "b2")


# ----------------------------- in-kernel math helpers -----------------------------

def _layernorm(x, gamma, beta):
    mu = jnp.mean(x, axis=-1, keepdims=True)
    var = jnp.mean((x - mu) ** 2, axis=-1, keepdims=True)
    return (x - mu) * jax.lax.rsqrt(var + LN_EPS) * gamma + beta


def _gelu_tanh(x):
    # tanh-approximate GELU (cheaper than the erf rational approximation on the VPU;
    # tanh goes to the EUP slot).  ~1e-3 relative drift vs exact erf GELU.
    c = math.sqrt(2.0 / math.pi)
    return 0.5 * x * (1.0 + jnp.tanh(c * (x + 0.044715 * x * x * x)))


def _vmem_limit_bytes(est_bytes):
    # generous margin, but stay well inside the smallest physical VMEM (v7x: 64 MiB/TC)
    return int(max(16 << 20, min(2 * est_bytes + (4 << 20), 56 << 20)))


# ----------------------------------- kernels -----------------------------------

def patch_embed_kernel(patches_ref, w_ref, b_ref, out_ref):
    # patches_ref: (1, P, K) bf16   w_ref: (K, D) bf16   b_ref: (1, D) f32
    p = patches_ref[0]
    out_ref[0] = (jnp.dot(p, w_ref[...], preferred_element_type=jnp.float32)
                  + b_ref[...])


def blocks_kernel(x_ref, ln1_g, ln1_b, wqkv, bqkv, wo, bo, ln2_g, ln2_b,
                  w1, b1, w2, b2, out_ref, h_sc, ctx_sc, *, num_heads, t_real):
    """One transformer layer per grid step; activation resident in h_sc across layers."""
    layer = pl.program_id(1)
    n_layers = pl.num_programs(1)

    @pl.when(layer == 0)
    def _():
        h_sc[...] = x_ref[0]

    x = h_sc[...]                                  # (T, D) f32 residual stream
    T, D = x.shape
    dh = D // num_heads
    scale = 1.0 / math.sqrt(dh)

    # ---- Multi-head self attention (pre-norm) ----
    hn = _layernorm(x, ln1_g[0], ln1_b[0]).astype(jnp.bfloat16)
    qkv = jnp.dot(hn, wqkv[0], preferred_element_type=jnp.float32) + bqkv[0]   # (T, 3D) f32
    q = qkv[:, 0:D]
    k = qkv[:, D:2 * D]
    v = qkv[:, 2 * D:3 * D]

    if t_real < T:   # static: mask padded key columns out of the softmax
        key_valid = jax.lax.broadcasted_iota(jnp.int32, (1, T), 1) < t_real

    # TODO(synk): batch the per-head score matmuls (einsum 'htd,hsd->hts') / add a
    # parallel q-tile grid axis for v7x's second TensorCore; both conflict with the
    # resident-activation layer fusion used here, so heads stay statically unrolled.
    for hh in range(num_heads):
        sl = slice(hh * dh, (hh + 1) * dh)
        qh = q[:, sl].astype(jnp.bfloat16)
        kh = k[:, sl].astype(jnp.bfloat16)
        vh = v[:, sl].astype(jnp.bfloat16)
        s = jnp.dot(qh, kh.T, preferred_element_type=jnp.float32) * scale      # (T, T) f32
        if t_real < T:
            s = jnp.where(key_valid, s, -1e30)
        s = s - jnp.max(s, axis=-1, keepdims=True)
        e = jnp.exp(s)
        p = e * pl.reciprocal(jnp.sum(e, axis=-1, keepdims=True), approx=True)
        ctx_sc[:, sl] = jnp.dot(p.astype(jnp.bfloat16), vh,
                                preferred_element_type=jnp.float32)            # (T, dh) f32
    # single fused output projection over all heads
    attn = (jnp.dot(ctx_sc[...].astype(jnp.bfloat16), wo[0],
                    preferred_element_type=jnp.float32) + bo[0])
    x = x + attn

    # ---- Position-wise feed-forward (pre-norm) ----
    h2 = _layernorm(x, ln2_g[0], ln2_b[0]).astype(jnp.bfloat16)
    h2 = jnp.dot(h2, w1[0], preferred_element_type=jnp.float32) + b1[0]        # (T, MLP) f32
    h2 = _gelu_tanh(h2).astype(jnp.bfloat16)
    h2 = jnp.dot(h2, w2[0], preferred_element_type=jnp.float32) + b2[0]        # (T, D) f32
    x = x + h2

    h_sc[...] = x

    @pl.when(layer == n_layers - 1)
    def _():
        out_ref[0] = x


def head_kernel(x_ref, g_ref, b_ref, w_ref, bias_ref, out_ref):
    # x_ref block is only the first 8 token rows; row 0 is the class token.
    x0 = x_ref[0][0:1, :]                                        # (1, D) f32
    x0 = _layernorm(x0, g_ref[...], b_ref[...]).astype(jnp.bfloat16)
    out_ref[...] = (jnp.dot(x0, w_ref[...], preferred_element_type=jnp.float32)
                    + bias_ref[...])


# ------------------------------ pallas_call wrappers ------------------------------

def _rep_spec(shape):
    # batch-replicated, grid-invariant parameter -> single buffered (no 2x VMEM / re-DMA)
    n = len(shape)
    return pl.BlockSpec(shape, lambda i, _n=n: (0,) * _n,
                        pipeline_mode=pl.Buffered(1))


def _nbytes(a):
    return int(a.size) * a.dtype.itemsize


def patch_embed(patches, w, b):
    B, P, K = patches.shape
    D = w.shape[1]
    est = 2 * P * K * 2 + 2 * P * D * 4 + _nbytes(w) + _nbytes(b) + P * D * 4
    return pl.pallas_call(
        patch_embed_kernel,
        out_shape=jax.ShapeDtypeStruct((B, P, D), jnp.float32),
        grid=(B,),
        in_specs=[pl.BlockSpec((1, P, K), lambda i: (i, 0, 0)),
                  _rep_spec(w.shape), _rep_spec(b.shape)],
        out_specs=pl.BlockSpec((1, P, D), lambda i: (i, 0, 0)),
        compiler_params=pltpu.CompilerParams(
            dimension_semantics=("parallel",),
            vmem_limit_bytes=_vmem_limit_bytes(est)),
    )(patches, w, b)


def transformer_blocks(x, blocks, *, num_heads, t_real):
    """Fused L-layer transformer: grid=(B, L), activation resident in VMEM over L."""
    B, T, D = x.shape
    L = blocks["wqkv"].shape[0]
    mlp = blocks["w1"].shape[2]
    weights = [blocks[name] for name in _BLOCK_PARAM_ORDER]

    in_specs = [pl.BlockSpec((1, T, D), lambda b, l: (b, 0, 0))]
    for w in weights:
        in_specs.append(pl.BlockSpec((1,) + w.shape[1:], lambda b, l: (l, 0, 0)))

    per_layer_w_bytes = sum(_nbytes(w[0:1]) for w in weights)
    act_bytes = T * D * 4
    tmp_bytes = (T * 3 * D + T * T + T * mlp + 2 * T * D) * 4 * 2
    est = 4 * act_bytes + 2 * per_layer_w_bytes + 2 * act_bytes + tmp_bytes

    return pl.pallas_call(
        functools.partial(blocks_kernel, num_heads=num_heads, t_real=t_real),
        out_shape=jax.ShapeDtypeStruct((B, T, D), jnp.float32),
        grid=(B, L),
        in_specs=in_specs,
        out_specs=pl.BlockSpec((1, T, D), lambda b, l: (b, 0, 0)),
        scratch_shapes=[pltpu.VMEM((T, D), jnp.float32),   # resident activation
                        pltpu.VMEM((T, D), jnp.float32)],  # per-head context assembly
        compiler_params=pltpu.CompilerParams(
            dimension_semantics=("parallel", "arbitrary"),
            vmem_limit_bytes=_vmem_limit_bytes(est)),
    )(x, *weights)


def head(x, g, b, w, bias):
    B, T, D = x.shape
    NCp = w.shape[1]
    est = 2 * 8 * D * 4 + _nbytes(w) + _nbytes(bias) + 2 * NCp * 4 + D * 8
    return pl.pallas_call(
        head_kernel,
        out_shape=jax.ShapeDtypeStruct((B, NCp), jnp.float32),
        grid=(B,),
        in_specs=[pl.BlockSpec((1, 8, D), lambda i: (i, 0, 0)),   # class-token rows only
                  _rep_spec(g.shape), _rep_spec(b.shape),
                  _rep_spec(w.shape), _rep_spec(bias.shape)],
        out_specs=pl.BlockSpec((1, NCp), lambda i: (i, 0)),
        compiler_params=pltpu.CompilerParams(
            dimension_semantics=("parallel",),
            vmem_limit_bytes=_vmem_limit_bytes(est)),
    )(x, g, b, w, bias)


# --------------------------------- full forward ---------------------------------

def image_encoder_forward(x, params, *, patch, num_heads, num_classes):
    """x: (B, C, H, W) float32 NCHW, returns (B, num_classes) float32."""
    B, C, Himg, Wimg = x.shape
    gh, gw = Himg // patch, Wimg // patch
    D = params["patch_w"].shape[1]

    # stride==kernel conv  ->  patch extraction (bf16 glue, half the transpose bytes)
    # + matmul (kernel)
    xb = x.astype(jnp.bfloat16)
    patches = xb.reshape(B, C, gh, patch, gw, patch)
    patches = patches.transpose(0, 2, 4, 1, 3, 5).reshape(B, gh * gw, C * patch * patch)
    tok = patch_embed(patches, params["patch_w"], params["patch_b"])       # (B, P, D) f32

    cls = jnp.broadcast_to(params["cls_token"][None], (B, 1, D))
    h = jnp.concatenate([cls, tok], axis=1) + params["pos_emb"][None]      # (B, T, D)

    T = h.shape[1]
    T_pad = ((T + 7) // 8) * 8                                             # sublane-dense
    if T_pad != T:
        h = jnp.pad(h, ((0, 0), (0, T_pad - T), (0, 0)))

    h = transformer_blocks(h, params["blocks"], num_heads=num_heads, t_real=T)

    logits = head(h, params["norm_g"], params["norm_b"],
                  params["fc_w"], params["fc_b"])                          # (B, NC_pad)
    return logits[:, :num_classes]


def init_params(key, *, C, patch, D, num_heads, layers, mlp, num_classes, T):
    del num_heads  # shapes don't depend on it (fused qkv dims == 3D)
    K = C * patch * patch
    nc_pad = ((num_classes + 127) // 128) * 128                            # lane-dense head
    keys = jax.random.split(key, 6 + layers)
    bf = jnp.bfloat16

    def nrm(k, shape, dtype=jnp.float32, scale=0.02):
        return (scale * jax.random.normal(k, shape)).astype(dtype)

    fc_w = jnp.zeros((D, nc_pad), bf).at[:, :num_classes].set(
        nrm(keys[4], (D, num_classes), bf))
    fc_b = jnp.zeros((1, nc_pad), jnp.float32).at[:, :num_classes].set(
        nrm(keys[5], (1, num_classes)))

    params = {
        "patch_w": nrm(keys[0], (K, D), bf),
        "patch_b": nrm(keys[1], (1, D)),
        "cls_token": nrm(keys[2], (1, D)),
        "pos_emb": nrm(keys[3], (T, D)),
        "norm_g": jnp.ones((1, D), jnp.float32),
        "norm_b": jnp.zeros((1, D), jnp.float32),
        "fc_w": fc_w,
        "fc_b": fc_b,
    }

    blk = {name: [] for name in _BLOCK_PARAM_ORDER}
    for l in range(layers):
        kk = jax.random.split(keys[6 + l], 12)
        wq, wk, wv = nrm(kk[0], (D, D), bf), nrm(kk[2], (D, D), bf), nrm(kk[4], (D, D), bf)
        bq, bk, bv = nrm(kk[1], (1, D)), nrm(kk[3], (1, D)), nrm(kk[5], (1, D))
        blk["ln1_g"].append(jnp.ones((1, D), jnp.float32))
        blk["ln1_b"].append(jnp.zeros((1, D), jnp.float32))
        blk["wqkv"].append(jnp.concatenate([wq, wk, wv], axis=1))          # (D, 3D) bf16
        blk["bqkv"].append(jnp.concatenate([bq, bk, bv], axis=1))          # (1, 3D) f32
        blk["wo"].append(nrm(kk[6], (D, D), bf))
        blk["bo"].append(nrm(kk[7], (1, D)))
        blk["ln2_g"].append(jnp.ones((1, D), jnp.float32))
        blk["ln2_b"].append(jnp.zeros((1, D), jnp.float32))
        blk["w1"].append(nrm(kk[8], (D, mlp), bf))
        blk["b1"].append(nrm(kk[9], (1, mlp)))
        blk["w2"].append(nrm(kk[10], (mlp, D), bf))
        blk["b2"].append(nrm(kk[11], (1, D)))

    # stack per-layer weights along a leading L axis for the fused-layer pallas_call
    params["blocks"] = {name: jnp.stack(v, axis=0) for name, v in blk.items()}
    return params


if __name__ == "__main__":
    # Small stand-in for ViT-B/16 @ 384: same structure, tiny dims.
    B, C, IMG, PATCH = 2, 3, 32, 8
    D, HEADS, LAYERS, MLP, NUM_CLASSES = 32, 4, 2, 64, 16
    P = (IMG // PATCH) ** 2
    T = P + 1

    key = jax.random.PRNGKey(0)
    k_param, k_x = jax.random.split(key)
    params = init_params(k_param, C=C, patch=PATCH, D=D, num_heads=HEADS,
                         layers=LAYERS, mlp=MLP, num_classes=NUM_CLASSES, T=T)
    x = jax.random.normal(k_x, (B, C, IMG, IMG), dtype=jnp.float32)  # NCHW input

    out = image_encoder_forward(x, params, patch=PATCH, num_heads=HEADS,
                                num_classes=NUM_CLASSES)
    out = jax.block_until_ready(out)
    assert out.shape == (B, NUM_CLASSES) and out.dtype == jnp.float32
    assert bool(jnp.all(jnp.isfinite(out)))
    print("KERNEL_OK")
</pallas_src>

<mosaic_0001>
module attributes {stable_mosaic.version = 11 : i64} {
  func.func @patch_embed_kernel(%arg0: i32, %arg1: memref<1x16x192xbf16, #tpu.memory_space<vmem>>, %arg2: memref<192x32xbf16, #tpu.memory_space<vmem>>, %arg3: memref<1x32xf32, #tpu.memory_space<vmem>>, %arg4: memref<1x16x32xf32, #tpu.memory_space<vmem>>) attributes {dimension_semantics = [#tpu.dimension_semantics<parallel>], iteration_bounds = array<i64: 2>, scalar_prefetch = 0 : i64, scratch_operands = 0 : i64, tpu.core_type = #tpu.core_type<tc>, window_params = [{transform_indices = @transform_0, window_bounds = array<i64: 1, 16, 192>}, {pipeline_mode = #tpu.pipeline_mode<synchronous>, transform_indices = @transform_1, window_bounds = array<i64: 192, 32>}, {pipeline_mode = #tpu.pipeline_mode<synchronous>, transform_indices = @transform_2, window_bounds = array<i64: 1, 32>}, {transform_indices = @transform_3, window_bounds = array<i64: 1, 16, 32>}]} {
    %c0 = arith.constant 0 : index
    %c0_0 = arith.constant 0 : index
    %c0_1 = arith.constant 0 : index
    %0 = vector.load %arg1[%c0, %c0_0, %c0_1] : memref<1x16x192xbf16, #tpu.memory_space<vmem>>, vector<1x16x192xbf16>
    %1 = vector.shape_cast %0 : vector<1x16x192xbf16> to vector<16x192xbf16>
    %c0_2 = arith.constant 0 : index
    %c0_3 = arith.constant 0 : index
    %2 = vector.load %arg2[%c0_2, %c0_3] : memref<192x32xbf16, #tpu.memory_space<vmem>>, vector<192x32xbf16>
    %cst = arith.constant dense<0.000000e+00> : vector<16x32xf32>
    %3 = tpu.matmul %1, %2, %cst {dimension_numbers = #tpu.dot_dimension_numbers<[1], [0], [0], [1], [0, 0, 1, 1], [], []>} : vector<16x192xbf16>, vector<192x32xbf16>, vector<16x32xf32> -> vector<16x32xf32>
    %c0_4 = arith.constant 0 : index
    %c0_5 = arith.constant 0 : index
    %4 = vector.load %arg3[%c0_4, %c0_5] : memref<1x32xf32, #tpu.memory_space<vmem>>, vector<1x32xf32>
    %5 = vector.broadcast %4 : vector<1x32xf32> to vector<16x32xf32>
    %6 = arith.addf %3, %5 : vector<16x32xf32>
    %c0_6 = arith.constant 0 : index
    %c0_7 = arith.constant 0 : index
    %c0_8 = arith.constant 0 : index
    %7 = vector.load %arg4[%c0_6, %c0_7, %c0_8] : memref<1x16x32xf32, #tpu.memory_space<vmem>>, vector<1x16x32xf32>
    %8 = vector.shape_cast %7 : vector<1x16x32xf32> to vector<16x32xf32>
    %9 = vector.shape_cast %6 : vector<16x32xf32> to vector<1x16x32xf32>
    tpu.vector_store %arg4[%c0_6, %c0_7, %c0_8], %9 {strides = array<i32>} : memref<1x16x32xf32, #tpu.memory_space<vmem>>, vector<1x16x32xf32>,
    return
  }
  func.func @transform_0(%arg0: i32) -> (i32, i32, i32) {
    %c0_i32 = arith.constant 0 : i32
    %c0_i32_0 = arith.constant 0 : i32
    %c0_i32_1 = arith.constant 0 : i32
    return %arg0, %c0_i32, %c0_i32_0 : i32, i32, i32
  }
  func.func @transform_1(%arg0: i32) -> (i32, i32) {
    %c0_i32 = arith.constant 0 : i32
    %c0_i32_0 = arith.constant 0 : i32
    %c0_i32_1 = arith.constant 0 : i32
    return %c0_i32, %c0_i32_0 : i32, i32
  }
  func.func @transform_2(%arg0: i32) -> (i32, i32) {
    %c0_i32 = arith.constant 0 : i32
    %c0_i32_0 = arith.constant 0 : i32
    %c0_i32_1 = arith.constant 0 : i32
    return %c0_i32, %c0_i32_0 : i32, i32
  }
  func.func @transform_3(%arg0: i32) -> (i32, i32, i32) {
    %c0_i32 = arith.constant 0 : i32
    %c0_i32_0 = arith.constant 0 : i32
    %c0_i32_1 = arith.constant 0 : i32
    return %arg0, %c0_i32, %c0_i32_0 : i32, i32, i32
  }
}

</mosaic_0001>

<llo_original>
// kernel: tpu_custom_call.1
$region0: #{tpu_custom_call.1}
  #allocation0 [shape = 'u32[]', space=smem, size = 0x4, offset = 0x4, fixed_abs, tag = 'smem constant byte address 0x4 - core index']
  #allocation1 [shape = 'u32[72,128]{1,0:T(1,128)}', space=vmem, size = 0x9000, scoped, tag = 'internal scratch']
  %s0 = inlined_call_operand.vmem [shape: bf16[2,16,192], index: 0, kind: input, shape index: {}]
  %s1 = inlined_call_operand.vmem [shape: bf16[192,32], index: 1, kind: input, shape index: {}]
  %s2 = inlined_call_operand.vmem [shape: f32[1,32], index: 2, kind: input, shape index: {}]
  %s3 = inlined_call_operand.hbm [shape: f32[2,16,32], index: 3, kind: output, shape index: {}]
  %s4 = sld [smem:[#allocation0]]
  $region45: #{tpu_custom_call.1} parent=0
    _
  %s6 = ssub.s32 1, %s4
  %s7 = scalar_select 0, %s6, %s4
  $region1: #{tpu_custom_call.1} parent=0
    #allocation2 [shape = 'u8[16384]{0}', space=vmem, size = 0x4000, scoped, tag = 'output window, operand 0']
    #allocation3 [shape = 's32[2]{0}', space=sflag, size = 0x8, scoped, tag = 'scoped memory for tpu_custom_call.1']
    %8 = vsyncpa [#allocation3], 0
    %s9 = scalar_lea.sflag [#allocation3], 1
    %10 = vsyncpa %s9, 0
    loop: start=0, step=1, limit=4
    $region2: #{tpu_custom_call.1} parent=1 // loop_pre_header
      _
    $region3: #{tpu_custom_call.1} parent=1 // loop_header
      %s12 = sphi 0, %s16
      %p13 = scmp.ge.s32.totalorder %s12, 4
      %s22 = sphi 0, %s24
      %s25 = sphi 0, %s22
      %s26 = sphi 0, %s25
      %s42 = sphi 0, %s26
      %s46 = sphi 0, %s46
      %s48 = sphi 0, %s46
      %s49 = sphi 0, %s48
      %s63 = sphi 0, %s49
      %s67 = sphi 0, %s67
      %s69 = sphi 0, %s67
      %s70 = sphi 0, %s69
      %s84 = sphi 0, %s70
      %s90 = sphi 0, %s92
      %s93 = sphi 0, %s90
      %s94 = sphi 0, %s93
      %s110 = sphi 0, %s94
    $region4: #{tpu_custom_call.1} parent=1 // loop_header_branch
      %15 = sbr.rel (%p13) target = $region8
    $region5: #{tpu_custom_call.1} parent=1 // loop_body
      %s17 = ssub.s32 %s12, 1
      %s18 = ssub.s32 %s12, 2
      %s19 = sadd.s32 %s12, 1
      %s20 = ssub.s32 %s12, %s19
      %p21 = scmp.eq.s32.totalorder %s20, 0
      %s23 = sadd.s32 %s22, 1
      %s24 = scalar_select %p21, %s22, %s23
      %p27 = pneg %p21
      %p28 = scmp.eq.s32.totalorder %s12, 1
      %p29 = por %p27, %p28
      %p30 = scmp.ne.s32.totalorder %s22, %s25
      %p31 = scmp.eq.s32.totalorder %s12, 0
      %p32 = por %p30, %p31
      %p33 = scmp.ne.s32.totalorder %s22, %s25
      %p34 = scmp.eq.s32.totalorder %s17, 1
      %p35 = por %p33, %p34
      %p36 = scmp.ne.s32.totalorder %s25, %s26
      %p37 = scmp.eq.s32.totalorder %s17, 0
      %p38 = por %p36, %p37
      %p39 = scmp.ne.s32.totalorder %s25, %s26
      %p40 = scmp.eq.s32.totalorder %s18, 1
      %p41 = por %p39, %p40
      %p43 = scmp.ne.s32.totalorder %s26, %s42
      %p44 = scmp.eq.s32.totalorder %s18, 0
      %p45 = por %p43, %p44
      %s47 = sadd.s32 %s46, 1
      %p50 = scmp.eq.s32.totalorder %s12, 1
      %p51 = scmp.ne.s32.totalorder %s46, %s48
      %p52 = scmp.eq.s32.totalorder %s12, 0
      %p53 = por %p51, %p52
      %p54 = scmp.ne.s32.totalorder %s46, %s48
      %p55 = scmp.eq.s32.totalorder %s17, 1
      %p56 = por %p54, %p55
      %p57 = scmp.ne.s32.totalorder %s48, %s49
      %p58 = scmp.eq.s32.totalorder %s17, 0
      %p59 = por %p57, %p58
      %p60 = scmp.ne.s32.totalorder %s48, %s49
      %p61 = scmp.eq.s32.totalorder %s18, 1
      %p62 = por %p60, %p61
      %p64 = scmp.ne.s32.totalorder %s49, %s63
      %p65 = scmp.eq.s32.totalorder %s18, 0
      %p66 = por %p64, %p65
      %s68 = sadd.s32 %s67, 1
      %p71 = scmp.eq.s32.totalorder %s12, 1
      %p72 = scmp.ne.s32.totalorder %s67, %s69
      %p73 = scmp.eq.s32.totalorder %s12, 0
      %p74 = por %p72, %p73
      %p75 = scmp.ne.s32.totalorder %s67, %s69
      %p76 = scmp.eq.s32.totalorder %s17, 1
      %p77 = por %p75, %p76
      %p78 = scmp.ne.s32.totalorder %s69, %s70
      %p79 = scmp.eq.s32.totalorder %s17, 0
      %p80 = por %p78, %p79
      %p81 = scmp.ne.s32.totalorder %s69, %s70
      %p82 = scmp.eq.s32.totalorder %s18, 1
      %p83 = por %p81, %p82
      %p85 = scmp.ne.s32.totalorder %s70, %s84
      %p86 = scmp.eq.s32.totalorder %s18, 0
      %p87 = por %p85, %p86
      %s88 = ssub.s32 %s12, %s19
      %p89 = scmp.eq.s32.totalorder %s88, 0
      %s91 = sadd.s32 %s90, 1
      %s92 = scalar_select %p89, %s90, %s91
      %p95 = pneg %p89
      %p96 = scmp.eq.s32.totalorder %s12, 1
      %p97 = por %p95, %p96
      %p98 = scmp.ne.s32.totalorder %s90, %s93
      %p99 = scmp.eq.s32.totalorder %s12, 0
      %p100 = por %p98, %p99
      %p101 = scmp.ne.s32.totalorder %s90, %s93
      %p102 = scmp.eq.s32.totalorder %s17, 1
      %p103 = por %p101, %p102
      %p104 = scmp.ne.s32.totalorder %s93, %s94
      %p105 = scmp.eq.s32.totalorder %s17, 0
      %p106 = por %p104, %p105
      %p107 = scmp.ne.s32.totalorder %s93, %s94
      %p108 = scmp.eq.s32.totalorder %s18, 1
      %p109 = por %p107, %p108
      %p111 = scmp.ne.s32.totalorder %s94, %s110
      %p112 = scmp.eq.s32.totalorder %s18, 0
      %p113 = por %p111, %p112
      %p114 = scmp.le.s32.totalorder 1, %s12
      %p115 = scmp.lt.s32.totalorder %s12, 3
      %p116 = pnand %p114, %p115
      %p117 = pneg %p116
      // Predicated region
      $region9: #{tpu_custom_call.1} parent=5 // pred_check
        _
      $region10: #{tpu_custom_call.1} parent=5 // pred_check_branch
        %119 = sbr.rel (%p116) target = $region12
      $region11: #{tpu_custom_call.1} parent=5 // pred_region
        %s120 = ssub.s32 %s12, 1
        // Predicated region
        $region13: #{tpu_custom_call.1} parent=11 // pred_check
          %p121 = pneg %p59
        $region14: #{tpu_custom_call.1} parent=11 // pred_check_branch
          %123 = sbr.rel (%p121) target = $region16
        $region15: #{tpu_custom_call.1} parent=11 // pred_region
          _
        $region16: #{tpu_custom_call.1} parent=11 // pred_fallthru
          _
        // Predicated region
        $region17: #{tpu_custom_call.1} parent=11 // pred_check
          %p124 = pneg %p80
        $region18: #{tpu_custom_call.1} parent=11 // pred_check_branch
          %126 = sbr.rel (%p124) target = $region20
        $region19: #{tpu_custom_call.1} parent=11 // pred_region
          _
        $region20: #{tpu_custom_call.1} parent=11 // pred_fallthru
          _
      $region12: #{tpu_custom_call.1} parent=5 // pred_fallthru
        _
      %p127 = scmp.lt.s32.totalorder %s12, 2
      // Predicated region
      $region21: #{tpu_custom_call.1} parent=5 // pred_check
        %p128 = pneg %p127
      $region22: #{tpu_custom_call.1} parent=5 // pred_check_branch
        %130 = sbr.rel (%p128) target = $region24
      $region23: #{tpu_custom_call.1} parent=5 // pred_region
        // Predicated region
        $region25: #{tpu_custom_call.1} parent=23 // pred_check
          %p131 = pneg %p32
        $region26: #{tpu_custom_call.1} parent=23 // pred_check_branch
          %133 = sbr.rel (%p131) target = $region28
        $region27: #{tpu_custom_call.1} parent=23 // pred_region
          %p134 = scmp.lt.s32.totalorder %s12, 1
          %s135 = scalar_select %p134, %s12, 1
          %s136 = smul.addr %s135, 4
          %s137 = smul.addr %s136, 4
          %s138 = scalar_lea.vmem %s0, %s137
        $region28: #{tpu_custom_call.1} parent=23 // pred_fallthru
          _
      $region24: #{tpu_custom_call.1} parent=5 // pred_fallthru
        _
      %p139 = scmp.le.s32.totalorder 1, %s12
      %p140 = scmp.lt.s32.totalorder %s12, 3
      %p141 = pnand %p139, %p140
      %p142 = pneg %p141
      // Predicated region
      $region29: #{tpu_custom_call.1} parent=5 // pred_check
        _
      $region30: #{tpu_custom_call.1} parent=5 // pred_check_branch
        %144 = sbr.rel (%p141) target = $region32
      $region31: #{tpu_custom_call.1} parent=5 // pred_region
        %s145 = ssub.s32 %s12, 1
        %p146 = scmp.lt.s32.totalorder %s17, 1
        %s147 = scalar_select %p146, %s17, 1
        %s148 = smul.addr %s147, 4
        %s149 = smul.addr %s148, 4
        %s150 = scalar_lea.vmem %s0, %s149
        %p151 = pneg %p38
        %p152 = pneg %p35
        %p153 = pneg %p59
        %p154 = pneg %p56
        %p155 = pneg %p80
        %p156 = pneg %p77
        %p157 = pneg %p106
        %p158 = pneg %p103
        %s159 = sand.u32 %s93, 1
        %s160 = scalar_lea.sflag [#allocation3], %s159
        %s161 = sand.u32 %s93, 1
        %s162 = smul.addr %s161, 16
        %s163 = scalar_lea.vmem [#allocation2], %s162
        %p164 = scmp.lt.s32.totalorder %s17, 1
        %s165 = scalar_select %p164, %s17, 1
        %s166 = smul.addr %s165, 4
        %s167 = smul.addr %s166, 4
        %s168 = scalar_lea.vmem %s0, %s167
        %v170 = vld [vmem:[%s168] sm:$0xff]
        %v171 = vld [vmem:[%s168 + $0x8] sm:$0xff]
        %v172 = vld [vmem:[%s1] sm:$0xf]
        %v173 = vld [vmem:[%s1 + $0x4] sm:$0xf]
        %v174 = vld [vmem:[%s1 + $0x8] sm:$0xf]
        %v175 = vld [vmem:[%s1 + $0xc] sm:$0xf]
        %v176 = vld [vmem:[%s1 + $0x10] sm:$0xf]
        %v177 = vld [vmem:[%s1 + $0x14] sm:$0xf]
        %v178 = vld [vmem:[%s1 + $0x18] sm:$0xf]
        %v179 = vld [vmem:[%s1 + $0x1c] sm:$0xf]
        %v180 = vld [vmem:[%s1 + $0x20] sm:$0xf]
        %v181 = vld [vmem:[%s1 + $0x24] sm:$0xf]
        %v182 = vld [vmem:[%s1 + $0x28] sm:$0xf]
        %v183 = vld [vmem:[%s1 + $0x2c] sm:$0xf]
        %v184 = vld [vmem:[%s1 + $0x30] sm:$0xf]
        %v185 = vld [vmem:[%s1 + $0x34] sm:$0xf]
        %v186 = vld [vmem:[%s1 + $0x38] sm:$0xf]
        %v187 = vld [vmem:[%s1 + $0x3c] sm:$0xf]
        %v188 = vld [vmem:[%s1 + $0x40] sm:$0xf]
        %v189 = vld [vmem:[%s1 + $0x44] sm:$0xf]
        %v190 = vld [vmem:[%s1 + $0x48] sm:$0xf]
        %v191 = vld [vmem:[%s1 + $0x4c] sm:$0xf]
        %v192 = vld [vmem:[%s1 + $0x50] sm:$0xf]
        %v193 = vld [vmem:[%s1 + $0x54] sm:$0xf]
        %v194 = vld [vmem:[%s1 + $0x58] sm:$0xf]
        %v195 = vld [vmem:[%s1 + $0x5c] sm:$0xf]
        %v196 = vld [vmem:[%s2] sm:$0x1]
        %v198 = vperm.slane %v196, 0
        %v202 = vunpack.c.l.b16 %v170
        %v203 = vunpack.c.h.b16 %v170
        %v204 = vunpack.c.l.b16 %v171
        %v205 = vunpack.c.h.b16 %v171
        %v206 = vpack.c.b16 %v204, %v202
        %v207 = vpack.c.b16 %v205, %v203
        %v233 = vunpack.c.l.b16 %v172
        %v234 = vunpack.c.l.b16 %v173
        %v235 = vunpack.c.l.b16 %v174
        %v236 = vunpack.c.l.b16 %v175
        %v237 = vunpack.c.l.b16 %v176
        %v238 = vunpack.c.l.b16 %v177
        %v239 = vunpack.c.l.b16 %v178
        %v240 = vunpack.c.l.b16 %v179
        %v241 = vunpack.c.l.b16 %v180
        %v242 = vunpack.c.l.b16 %v181
        %v243 = vunpack.c.l.b16 %v182
        %v244 = vunpack.c.l.b16 %v183
        %v245 = vunpack.c.l.b16 %v184
        %v246 = vunpack.c.l.b16 %v185
        %v247 = vunpack.c.l.b16 %v186
        %v248 = vunpack.c.l.b16 %v187
        %v249 = vunpack.c.l.b16 %v188
        %v250 = vunpack.c.l.b16 %v189
        %v251 = vunpack.c.l.b16 %v190
        %v252 = vunpack.c.l.b16 %v191
        %v253 = vunpack.c.l.b16 %v192
        %v254 = vunpack.c.l.b16 %v193
        %v255 = vunpack.c.l.b16 %v194
        %v256 = vunpack.c.l.b16 %v195
        %v257 = vpack.c.b16 %v234, %v233
        %v258 = vpack.c.b16 %v236, %v235
        %v259 = vpack.c.b16 %v238, %v237
        %v260 = vpack.c.b16 %v240, %v239
        %v261 = vpack.c.b16 %v242, %v241
        %v262 = vpack.c.b16 %v244, %v243
        %v263 = vpack.c.b16 %v246, %v245
        %v264 = vpack.c.b16 %v248, %v247
        %v265 = vpack.c.b16 %v250, %v249
        %v266 = vpack.c.b16 %v252, %v251
        %v267 = vpack.c.b16 %v254, %v253
        %v268 = vpack.c.b16 %v256, %v255
        %vm281 = vcmask 523264
        %v283 = vsel %vm281, %v207, 0
        %285 = vmatpush.bf16.msra.mxu0 %v264
        %286 = vmatpush.bf16.msra.mxu0 %v263
        %287 = vmatpush.bf16.msra.mxu0 %v262
        %288 = vmatpush.bf16.msra.mxu0 %v261
        %289 = vmatpush.bf16.msra.mxu0 %v260
        %290 = vmatpush.bf16.msra.mxu0 %v259
        %291 = vmatpush.bf16.msra.mxu0 %v258
        %292 = vmatpush.bf16.msra.mxu0 %v257
        %293 = vmatmul.bf16.gmra.mxu0 %v206
        %v294 = vpop.f32.mrf.mxu0
        %v295 = vadd.f32 %v198, %v294
        %v296 = vpop.f32.mrf.mxu0
        %v297 = vadd.f32 %v198, %v296
        %298 = vdwg.mxu0
        %299 = vmatpush.bf16.msra.mxu0 0
        %300 = vmatpush.bf16.msra.mxu0 0
        %301 = vmatpush.bf16.msra.mxu0 0
        %302 = vmatpush.bf16.msra.mxu0 0
        %303 = vmatpush.bf16.msra.mxu0 %v268
        %304 = vmatpush.bf16.msra.mxu0 %v267
        %305 = vmatpush.bf16.msra.mxu0 %v266
        %306 = vmatpush.bf16.msra.mxu0 %v265
        %307 = vmatmul.bf16.gmra.mxu0 %v283
        %v308 = vpop.f32.mrf.mxu0
        %v309 = vadd.f32 %v295, %v308
        %v310 = vpop.f32.mrf.mxu0
        %v311 = vadd.f32 %v297, %v310
        %312 = vdwg.mxu0
        %vm313 = vcmask 261120
        %314 = vst.msk [vmem:[%s163] sm:$0xff] %vm313, %v309
        %315 = vst.msk [vmem:[%s163 + $0x8] sm:$0xff] %vm313, %v311
        %s316 = sand.u32 %s93, 1
        %s317 = scalar_lea.sflag [#allocation3], %s316
        %s318 = sand.u32 %s93, 1
        %s319 = smul.addr %s318, 16
        %s320 = scalar_lea.vmem [#allocation2], %s319
        // Predicated region
        $region33: #{tpu_custom_call.1} parent=31 // pred_check
          %p321 = pneg %p103
        $region34: #{tpu_custom_call.1} parent=31 // pred_check_branch
          %323 = sbr.rel (%p321) target = $region36
        $region35: #{tpu_custom_call.1} parent=31 // pred_region
          %325 = vsyncadd %s317, 0
          %s326 = smul.addr %s17, 2
          %s327 = smul.addr %s326, 8
          %s328 = scalar_lea.hbm %s3, %s327
          %s329 = sshll.u32 %s320, 4
          %s330 = int_to_ptr.vmem [resolvable:$true] %s329
          %s331 = sshll.u32 %s328, 4
          %s332 = int_to_ptr.hbm [resolvable:$true] %s331
          %337 = dma.vmem_to_hbm [thread:$0]  %s330, 256, %s332, %s317, 128, 128, 8
        $region36: #{tpu_custom_call.1} parent=31 // pred_fallthru
          _
      $region32: #{tpu_custom_call.1} parent=5 // pred_fallthru
        _
      %p338 = scmp.le.s32.totalorder 2, %s12
      // Predicated region
      $region37: #{tpu_custom_call.1} parent=5 // pred_check
        %p339 = pneg %p338
      $region38: #{tpu_custom_call.1} parent=5 // pred_check_branch
        %341 = sbr.rel (%p339) target = $region40
      $region39: #{tpu_custom_call.1} parent=5 // pred_region
        %s342 = ssub.s32 %s12, 2
        // Predicated region
        $region41: #{tpu_custom_call.1} parent=39 // pred_check
          %p343 = pneg %p109
        $region42: #{tpu_custom_call.1} parent=39 // pred_check_branch
          %345 = sbr.rel (%p343) target = $region44
        $region43: #{tpu_custom_call.1} parent=39 // pred_region
          %s346 = sand.u32 %s94, 1
          %s347 = scalar_lea.sflag [#allocation3], %s346
          %s348 = sand.u32 %s94, 1
          %s349 = smul.addr %s348, 16
          %s350 = scalar_lea.vmem [#allocation2], %s349
          %352 = dma.done %s347, 256
        $region44: #{tpu_custom_call.1} parent=39 // pred_fallthru
          _
      $region40: #{tpu_custom_call.1} parent=5 // pred_fallthru
        _
    $region6: #{tpu_custom_call.1} parent=1 // loop_footer
      %s16 = sadd.s32 1, %s12
    $region7: #{tpu_custom_call.1} parent=1 // loop_footer_branch
      %11 = sbr.rel target = $region3
    $region8: #{tpu_custom_call.1} parent=1 // loop_exit
      _
    %353 = vsyncpa [#allocation3], 1
    %s354 = scalar_lea.sflag [#allocation3], 1
    %355 = vsyncpa %s354, 1

</llo_original>
